<compile_context>
chip_gen: v5e
topology: v5e:2x2
jax: 0.10.0
libtpu: 0.0.40
codegen_flags: <defaults>
</compile_context>

<pallas_src>
import math
import jax
import jax.numpy as jnp
from jax.experimental import pallas as pl
from jax.experimental.pallas import tpu as pltpu

LN_EPS = 1e-5


def mlp_kernel(x_ref, wh_ref, bh_ref, g_ref, be_ref, wo_ref, bo_ref, o_ref):
    """Fused MLP, lane-dense layout (features on sublanes, points on lanes).

    (num_layers-2) x [Linear -> LayerNorm -> ReLU] -> Linear.
    """
    h = x_ref[...].astype(jnp.float32)                    # (H, TM)
    num_hidden_blocks = wh_ref.shape[0]                   # static at trace time
    inv_h = 1.0 / float(wh_ref.shape[1])
    # Small L -> static unroll.  TODO(synk): for large L switch to
    # lax.fori_loop(..., unroll=True) with dynamic wh_ref[l] indexing to bound vreg
    # live ranges while keeping LLO scheduler visibility.
    for l in range(num_hidden_blocks):
        w = wh_ref[l]                                      # (H_out, H_in) torch layout
        h = jnp.dot(w, h, preferred_element_type=jnp.float32) + bh_ref[l]
        # LayerNorm over the feature (sublane) axis, elementwise affine.
        # Fused one-pass stats; variance clamped against f32 cancellation.
        mu = jnp.sum(h, axis=0, keepdims=True) * inv_h     # (1, TM)
        ms = jnp.sum(h * h, axis=0, keepdims=True) * inv_h
        var = jnp.maximum(ms - mu * mu, 0.0)
        h = (h - mu) * jax.lax.rsqrt(var + LN_EPS)
        h = h * g_ref[l] + be_ref[l]                       # (H, 1) lane-broadcast affine
        h = jnp.maximum(h, 0.0)                            # ReLU
    # Output linear: (C, H) @ (H, TM) -> (C, TM); full-width lane-dense store.
    out = jnp.dot(wo_ref[...], h, preferred_element_type=jnp.float32) + bo_ref[...]
    o_ref[...] = out.astype(o_ref.dtype)


def _round_up(n, m):
    return ((n + m - 1) // m) * m


def _physical_vmem_bytes():
    try:
        return int(pltpu.get_tpu_info().vmem_capacity_bytes)
    except Exception:
        return 64 << 20          # conservative fallback: v7x per-TensorCore VMEM


def mlp_forward(x, wh, bh, gamma, beta, wo, bo, *, tile_m=None):
    """x: (N, H).  wh: (L, H, H), wo: (C, H) in torch (out, in) layout.
    bh/gamma/beta: (L, H), bo: (C,).  Returns (N, C)."""
    N, H = x.shape
    L, C = wh.shape[0], wo.shape[0]

    if tile_m is None:
        # grid=1 at small N (v5e/v6e are single-TensorCore, so a multi-step grid is a
        # serial loop that only adds per-step overhead); cap at 512 for large N to
        # amortize the ~0.35us/step cost without blowing vreg live ranges.
        # On v7x pick tile_m so the grid has >= 2 steps for megacore sharding.
        tile_m = min(512, _round_up(max(N, 1), 128))
    assert tile_m % 128 == 0, "tile_m must be a multiple of 128 lanes"

    # Lane-dense compute layout: one wrapper-side transpose puts points on lanes.
    x_t = x.T                                    # (H, N)
    # Column-vector params so per-layer slices broadcast along the lane axis.
    bh_c = bh.reshape(L, H, 1)
    g_c = gamma.reshape(L, H, 1)
    be_c = beta.reshape(L, H, 1)
    bo_c = bo.reshape(C, 1)

    grid = (pl.cdiv(N, tile_m),)                 # no jnp.pad of x

    # Chip-aware scoped-VMEM budget: resident params (x2 for default double-buffering)
    # + pipelined x/out tiles + compiler-scratch headroom, clamped to 85% of physical.
    param_bytes = 4 * (wh.size + bh.size + gamma.size + beta.size + wo.size + bo.size)
    tile_bytes = 4 * tile_m * (H + C)
    vmem_limit = min(int(2 * param_bytes + 2 * tile_bytes + (8 << 20)),
                     int(0.85 * _physical_vmem_bytes()))

    out_t = pl.pallas_call(
        mlp_kernel,
        out_shape=jax.ShapeDtypeStruct((C, N), jnp.float32),
        grid_spec=pltpu.PrefetchScalarGridSpec(
            num_scalar_prefetch=0,
            grid=grid,
            in_specs=[
                pl.BlockSpec((H, tile_m), lambda i: (0, i)),     # x, points on lanes
                pl.BlockSpec((L, H, H), lambda i: (0, 0, 0)),    # hidden weights (resident)
                pl.BlockSpec((L, H, 1), lambda i: (0, 0, 0)),    # hidden biases
                pl.BlockSpec((L, H, 1), lambda i: (0, 0, 0)),    # LN gamma
                pl.BlockSpec((L, H, 1), lambda i: (0, 0, 0)),    # LN beta
                pl.BlockSpec((C, H), lambda i: (0, 0)),          # output weight (out, in)
                pl.BlockSpec((C, 1), lambda i: (0, 0)),          # output bias
            ],
            out_specs=pl.BlockSpec((C, tile_m), lambda i: (0, i)),
        ),
        compiler_params=pltpu.CompilerParams(
            dimension_semantics=("parallel",),
            vmem_limit_bytes=vmem_limit,
        ),
    )(x_t, wh, bh_c, g_c, be_c, wo, bo_c)

    # Channel-major (C, N) -> module layout (N, C): tiny transpose (N*C elements),
    # vs. the previous 128-lane zero-pad + post-call slice (~32x output HBM traffic).
    return out_t.T


def kaiming_uniform(key, shape_out_in, nonlinearity):
    """torch.nn.init.kaiming_uniform_: weight shape (out, in), fan_in = in."""
    fan_in = shape_out_in[1]
    gain = math.sqrt(2.0) if nonlinearity == "relu" else 1.0
    bound = gain * math.sqrt(3.0 / fan_in)
    return jax.random.uniform(key, shape_out_in, jnp.float32, -bound, bound)


def build_params(key, num_hidden, out_channels, num_layers, use_bias=True):
    n_blocks = num_layers - 2
    keys = jax.random.split(key, n_blocks + 1)
    # hidden Linear layers, kaiming_uniform(nonlinearity='relu'), bias=0
    wh = jnp.stack([kaiming_uniform(keys[i], (num_hidden, num_hidden), "relu")
                    for i in range(n_blocks)])                        # (L, out, in)
    bh = jnp.zeros((n_blocks, num_hidden), jnp.float32)
    # LayerNorm affine params (torch default init)
    gamma = jnp.ones((n_blocks, num_hidden), jnp.float32)
    beta = jnp.zeros((n_blocks, num_hidden), jnp.float32)
    # output Linear, kaiming_uniform(nonlinearity='linear'), bias=0
    wo = kaiming_uniform(keys[-1], (out_channels, num_hidden), "linear")   # (out, in)
    bo = jnp.zeros((out_channels,), jnp.float32)
    return wh, bh, gamma, beta, wo, bo


def reference_forward(x, wh, bh, gamma, beta, wo, bo):
    h = x
    for l in range(wh.shape[0]):
        h = h @ wh[l].T + bh[l][None, :]
        mu = jnp.mean(h, axis=-1, keepdims=True)
        var = jnp.mean((h - mu) ** 2, axis=-1, keepdims=True)
        h = (h - mu) / jnp.sqrt(var + LN_EPS)
        h = h * gamma[l][None, :] + beta[l][None, :]
        h = jnp.maximum(h, 0.0)
    return h @ wo.T + bo[None, :]


if __name__ == "__main__":
    # Small config: num_hidden=32, out_channels=4, num_layers=4 (-> 2 hidden blocks),
    # nonlinear_class=ReLU, norm_class=LayerNorm, use_bias=True.
    num_hidden, out_channels, num_layers = 32, 4, 4
    N = 256        # flat batch of coordinate/feature points

    key = jax.random.PRNGKey(0)
    kx, kp = jax.random.split(key)
    x = jax.random.normal(kx, (N, num_hidden), jnp.float32)
    params = build_params(kp, num_hidden, out_channels, num_layers, use_bias=True)

    # Default tile_m -> 256 -> grid=1 (best for v5e/v6e at this size).
    # On v7x, pass tile_m=128 to give both TensorCores a grid step.
    out = mlp_forward(x, *params)
    out = jax.block_until_ready(out)

    ref = reference_forward(x, *params)
    assert out.shape == (N, out_channels)
    assert jnp.allclose(out, ref, atol=1e-4, rtol=1e-4), "mismatch vs reference"
    print("KERNEL_OK")
</pallas_src>

<mosaic_0001>
module attributes {stable_mosaic.version = 11 : i64} {
  func.func @mlp_kernel(%arg0: i32, %arg1: memref<32x256xf32, #tpu.memory_space<vmem>>, %arg2: memref<2x32x32xf32, #tpu.memory_space<vmem>>, %arg3: memref<2x32x1xf32, #tpu.memory_space<vmem>>, %arg4: memref<2x32x1xf32, #tpu.memory_space<vmem>>, %arg5: memref<2x32x1xf32, #tpu.memory_space<vmem>>, %arg6: memref<4x32xf32, #tpu.memory_space<vmem>>, %arg7: memref<4x1xf32, #tpu.memory_space<vmem>>, %arg8: memref<4x256xf32, #tpu.memory_space<vmem>>) attributes {dimension_semantics = [#tpu.dimension_semantics<parallel>], iteration_bounds = array<i64: 1>, scalar_prefetch = 0 : i64, scratch_operands = 0 : i64, tpu.core_type = #tpu.core_type<tc>, window_params = [{transform_indices = @transform_0, window_bounds = array<i64: 32, 256>}, {pipeline_mode = #tpu.pipeline_mode<synchronous>, transform_indices = @transform_1, window_bounds = array<i64: 2, 32, 32>}, {pipeline_mode = #tpu.pipeline_mode<synchronous>, transform_indices = @transform_2, window_bounds = array<i64: 2, 32, 1>}, {pipeline_mode = #tpu.pipeline_mode<synchronous>, transform_indices = @transform_3, window_bounds = array<i64: 2, 32, 1>}, {pipeline_mode = #tpu.pipeline_mode<synchronous>, transform_indices = @transform_4, window_bounds = array<i64: 2, 32, 1>}, {pipeline_mode = #tpu.pipeline_mode<synchronous>, transform_indices = @transform_5, window_bounds = array<i64: 4, 32>}, {pipeline_mode = #tpu.pipeline_mode<synchronous>, transform_indices = @transform_6, window_bounds = array<i64: 4, 1>}, {transform_indices = @transform_7, window_bounds = array<i64: 4, 256>}]} {
    %c0 = arith.constant 0 : index
    %c0_0 = arith.constant 0 : index
    %0 = vector.load %arg1[%c0, %c0_0] : memref<32x256xf32, #tpu.memory_space<vmem>>, vector<32x256xf32>
    %c0_1 = arith.constant 0 : index
    %c0_2 = arith.constant 0 : index
    %c0_3 = arith.constant 0 : index
    %1 = vector.load %arg2[%c0_1, %c0_2, %c0_3] : memref<2x32x32xf32, #tpu.memory_space<vmem>>, vector<1x32x32xf32>
    %2 = vector.shape_cast %1 : vector<1x32x32xf32> to vector<32x32xf32>
    %cst = arith.constant dense<0.000000e+00> : vector<32x256xf32>
    %3 = tpu.matmul %2, %0, %cst {dimension_numbers = #tpu.dot_dimension_numbers<[1], [0], [0], [1], [0, 0, 1, 1], [], []>} : vector<32x32xf32>, vector<32x256xf32>, vector<32x256xf32> -> vector<32x256xf32>
    %c0_4 = arith.constant 0 : index
    %c0_5 = arith.constant 0 : index
    %c0_6 = arith.constant 0 : index
    %4 = vector.load %arg3[%c0_4, %c0_5, %c0_6] : memref<2x32x1xf32, #tpu.memory_space<vmem>>, vector<1x32x1xf32>
    %5 = vector.shape_cast %4 : vector<1x32x1xf32> to vector<32x1xf32>
    %6 = vector.broadcast %5 : vector<32x1xf32> to vector<32x256xf32>
    %7 = arith.addf %3, %6 : vector<32x256xf32>
    %cst_7 = arith.constant dense<0.000000e+00> : vector<256xf32>
    %8 = vector.multi_reduction <add>, %7, %cst_7 [0] : vector<32x256xf32> to vector<256xf32>
    %9 = vector.shape_cast %8 : vector<256xf32> to vector<1x256xf32>
    %cst_8 = arith.constant 3.125000e-02 : f32
    %10 = vector.broadcast %cst_8 : f32 to vector<1x256xf32>
    %11 = arith.mulf %9, %10 : vector<1x256xf32>
    %12 = arith.mulf %7, %7 : vector<32x256xf32>
    %cst_9 = arith.constant dense<0.000000e+00> : vector<256xf32>
    %13 = vector.multi_reduction <add>, %12, %cst_9 [0] : vector<32x256xf32> to vector<256xf32>
    %14 = vector.shape_cast %13 : vector<256xf32> to vector<1x256xf32>
    %cst_10 = arith.constant 3.125000e-02 : f32
    %15 = vector.broadcast %cst_10 : f32 to vector<1x256xf32>
    %16 = arith.mulf %14, %15 : vector<1x256xf32>
    %17 = arith.mulf %11, %11 : vector<1x256xf32>
    %18 = arith.subf %16, %17 : vector<1x256xf32>
    %cst_11 = arith.constant 0.000000e+00 : f32
    %19 = vector.broadcast %cst_11 : f32 to vector<1x256xf32>
    %20 = arith.maximumf %18, %19 : vector<1x256xf32>
    %21 = vector.broadcast %11 : vector<1x256xf32> to vector<32x256xf32>
    %22 = arith.subf %7, %21 : vector<32x256xf32>
    %cst_12 = arith.constant 9.99999974E-6 : f32
    %23 = vector.broadcast %cst_12 : f32 to vector<1x256xf32>
    %24 = arith.addf %20, %23 : vector<1x256xf32>
    %25 = math.rsqrt %24 : vector<1x256xf32>
    %26 = vector.broadcast %25 : vector<1x256xf32> to vector<32x256xf32>
    %27 = arith.mulf %22, %26 : vector<32x256xf32>
    %c0_13 = arith.constant 0 : index
    %c0_14 = arith.constant 0 : index
    %c0_15 = arith.constant 0 : index
    %28 = vector.load %arg4[%c0_13, %c0_14, %c0_15] : memref<2x32x1xf32, #tpu.memory_space<vmem>>, vector<1x32x1xf32>
    %29 = vector.shape_cast %28 : vector<1x32x1xf32> to vector<32x1xf32>
    %30 = vector.broadcast %29 : vector<32x1xf32> to vector<32x256xf32>
    %31 = arith.mulf %27, %30 : vector<32x256xf32>
    %c0_16 = arith.constant 0 : index
    %c0_17 = arith.constant 0 : index
    %c0_18 = arith.constant 0 : index
    %32 = vector.load %arg5[%c0_16, %c0_17, %c0_18] : memref<2x32x1xf32, #tpu.memory_space<vmem>>, vector<1x32x1xf32>
    %33 = vector.shape_cast %32 : vector<1x32x1xf32> to vector<32x1xf32>
    %34 = vector.broadcast %33 : vector<32x1xf32> to vector<32x256xf32>
    %35 = arith.addf %31, %34 : vector<32x256xf32>
    %cst_19 = arith.constant 0.000000e+00 : f32
    %36 = vector.broadcast %cst_19 : f32 to vector<32x256xf32>
    %37 = arith.maximumf %35, %36 : vector<32x256xf32>
    %c1 = arith.constant 1 : index
    %c0_20 = arith.constant 0 : index
    %c0_21 = arith.constant 0 : index
    %38 = vector.load %arg2[%c1, %c0_20, %c0_21] : memref<2x32x32xf32, #tpu.memory_space<vmem>>, vector<1x32x32xf32>
    %39 = vector.shape_cast %38 : vector<1x32x32xf32> to vector<32x32xf32>
    %cst_22 = arith.constant dense<0.000000e+00> : vector<32x256xf32>
    %40 = tpu.matmul %39, %37, %cst_22 {dimension_numbers = #tpu.dot_dimension_numbers<[1], [0], [0], [1], [0, 0, 1, 1], [], []>} : vector<32x32xf32>, vector<32x256xf32>, vector<32x256xf32> -> vector<32x256xf32>
    %c1_23 = arith.constant 1 : index
    %c0_24 = arith.constant 0 : index
    %c0_25 = arith.constant 0 : index
    %41 = vector.load %arg3[%c1_23, %c0_24, %c0_25] : memref<2x32x1xf32, #tpu.memory_space<vmem>>, vector<1x32x1xf32>
    %42 = vector.shape_cast %41 : vector<1x32x1xf32> to vector<32x1xf32>
    %43 = vector.broadcast %42 : vector<32x1xf32> to vector<32x256xf32>
    %44 = arith.addf %40, %43 : vector<32x256xf32>
    %cst_26 = arith.constant dense<0.000000e+00> : vector<256xf32>
    %45 = vector.multi_reduction <add>, %44, %cst_26 [0] : vector<32x256xf32> to vector<256xf32>
    %46 = vector.shape_cast %45 : vector<256xf32> to vector<1x256xf32>
    %cst_27 = arith.constant 3.125000e-02 : f32
    %47 = vector.broadcast %cst_27 : f32 to vector<1x256xf32>
    %48 = arith.mulf %46, %47 : vector<1x256xf32>
    %49 = arith.mulf %44, %44 : vector<32x256xf32>
    %cst_28 = arith.constant dense<0.000000e+00> : vector<256xf32>
    %50 = vector.multi_reduction <add>, %49, %cst_28 [0] : vector<32x256xf32> to vector<256xf32>
    %51 = vector.shape_cast %50 : vector<256xf32> to vector<1x256xf32>
    %cst_29 = arith.constant 3.125000e-02 : f32
    %52 = vector.broadcast %cst_29 : f32 to vector<1x256xf32>
    %53 = arith.mulf %51, %52 : vector<1x256xf32>
    %54 = arith.mulf %48, %48 : vector<1x256xf32>
    %55 = arith.subf %53, %54 : vector<1x256xf32>
    %cst_30 = arith.constant 0.000000e+00 : f32
    %56 = vector.broadcast %cst_30 : f32 to vector<1x256xf32>
    %57 = arith.maximumf %55, %56 : vector<1x256xf32>
    %58 = vector.broadcast %48 : vector<1x256xf32> to vector<32x256xf32>
    %59 = arith.subf %44, %58 : vector<32x256xf32>
    %cst_31 = arith.constant 9.99999974E-6 : f32
    %60 = vector.broadcast %cst_31 : f32 to vector<1x256xf32>
    %61 = arith.addf %57, %60 : vector<1x256xf32>
    %62 = math.rsqrt %61 : vector<1x256xf32>
    %63 = vector.broadcast %62 : vector<1x256xf32> to vector<32x256xf32>
    %64 = arith.mulf %59, %63 : vector<32x256xf32>
    %c1_32 = arith.constant 1 : index
    %c0_33 = arith.constant 0 : index
    %c0_34 = arith.constant 0 : index
    %65 = vector.load %arg4[%c1_32, %c0_33, %c0_34] : memref<2x32x1xf32, #tpu.memory_space<vmem>>, vector<1x32x1xf32>
    %66 = vector.shape_cast %65 : vector<1x32x1xf32> to vector<32x1xf32>
    %67 = vector.broadcast %66 : vector<32x1xf32> to vector<32x256xf32>
    %68 = arith.mulf %64, %67 : vector<32x256xf32>
    %c1_35 = arith.constant 1 : index
    %c0_36 = arith.constant 0 : index
    %c0_37 = arith.constant 0 : index
    %69 = vector.load %arg5[%c1_35, %c0_36, %c0_37] : memref<2x32x1xf32, #tpu.memory_space<vmem>>, vector<1x32x1xf32>
    %70 = vector.shape_cast %69 : vector<1x32x1xf32> to vector<32x1xf32>
    %71 = vector.broadcast %70 : vector<32x1xf32> to vector<32x256xf32>
    %72 = arith.addf %68, %71 : vector<32x256xf32>
    %cst_38 = arith.constant 0.000000e+00 : f32
    %73 = vector.broadcast %cst_38 : f32 to vector<32x256xf32>
    %74 = arith.maximumf %72, %73 : vector<32x256xf32>
    %c0_39 = arith.constant 0 : index
    %c0_40 = arith.constant 0 : index
    %75 = vector.load %arg6[%c0_39, %c0_40] : memref<4x32xf32, #tpu.memory_space<vmem>>, vector<4x32xf32>
    %cst_41 = arith.constant dense<0.000000e+00> : vector<4x256xf32>
    %76 = tpu.matmul %75, %74, %cst_41 {dimension_numbers = #tpu.dot_dimension_numbers<[1], [0], [0], [1], [0, 0, 1, 1], [], []>} : vector<4x32xf32>, vector<32x256xf32>, vector<4x256xf32> -> vector<4x256xf32>
    %c0_42 = arith.constant 0 : index
    %c0_43 = arith.constant 0 : index
    %77 = vector.load %arg7[%c0_42, %c0_43] : memref<4x1xf32, #tpu.memory_space<vmem>>, vector<4x1xf32>
    %78 = vector.broadcast %77 : vector<4x1xf32> to vector<4x256xf32>
    %79 = arith.addf %76, %78 : vector<4x256xf32>
    %c0_44 = arith.constant 0 : index
    %c0_45 = arith.constant 0 : index
    %80 = vector.load %arg8[%c0_44, %c0_45] : memref<4x256xf32, #tpu.memory_space<vmem>>, vector<4x256xf32>
    tpu.vector_store %arg8[%c0_44, %c0_45], %79 {strides = array<i32>} : memref<4x256xf32, #tpu.memory_space<vmem>>, vector<4x256xf32>,
    return
  }
  func.func @transform_0(%arg0: i32) -> (i32, i32) {
    %c0_i32 = arith.constant 0 : i32
    %c0_i32_0 = arith.constant 0 : i32
    return %c0_i32, %arg0 : i32, i32
  }
  func.func @transform_1(%arg0: i32) -> (i32, i32, i32) {
    %c0_i32 = arith.constant 0 : i32
    %c0_i32_0 = arith.constant 0 : i32
    %c0_i32_1 = arith.constant 0 : i32
    %c0_i32_2 = arith.constant 0 : i32
    return %c0_i32, %c0_i32_0, %c0_i32_1 : i32, i32, i32
  }
  func.func @transform_2(%arg0: i32) -> (i32, i32, i32) {
    %c0_i32 = arith.constant 0 : i32
    %c0_i32_0 = arith.constant 0 : i32
    %c0_i32_1 = arith.constant 0 : i32
    %c0_i32_2 = arith.constant 0 : i32
    return %c0_i32, %c0_i32_0, %c0_i32_1 : i32, i32, i32
  }
  func.func @transform_3(%arg0: i32) -> (i32, i32, i32) {
    %c0_i32 = arith.constant 0 : i32
    %c0_i32_0 = arith.constant 0 : i32
    %c0_i32_1 = arith.constant 0 : i32
    %c0_i32_2 = arith.constant 0 : i32
    return %c0_i32, %c0_i32_0, %c0_i32_1 : i32, i32, i32
  }
  func.func @transform_4(%arg0: i32) -> (i32, i32, i32) {
    %c0_i32 = arith.constant 0 : i32
    %c0_i32_0 = arith.constant 0 : i32
    %c0_i32_1 = arith.constant 0 : i32
    %c0_i32_2 = arith.constant 0 : i32
    return %c0_i32, %c0_i32_0, %c0_i32_1 : i32, i32, i32
  }
  func.func @transform_5(%arg0: i32) -> (i32, i32) {
    %c0_i32 = arith.constant 0 : i32
    %c0_i32_0 = arith.constant 0 : i32
    %c0_i32_1 = arith.constant 0 : i32
    return %c0_i32, %c0_i32_0 : i32, i32
  }
  func.func @transform_6(%arg0: i32) -> (i32, i32) {
    %c0_i32 = arith.constant 0 : i32
    %c0_i32_0 = arith.constant 0 : i32
    %c0_i32_1 = arith.constant 0 : i32
    return %c0_i32, %c0_i32_0 : i32, i32
  }
  func.func @transform_7(%arg0: i32) -> (i32, i32) {
    %c0_i32 = arith.constant 0 : i32
    %c0_i32_0 = arith.constant 0 : i32
    return %c0_i32, %arg0 : i32, i32
  }
}

</mosaic_0001>

<llo_original>
// kernel: tpu_custom_call.1
$region0: #{tpu_custom_call.1}
  #allocation0 [shape = 'u32[]', space=smem, size = 0x4, offset = 0x4, fixed_abs, tag = 'smem constant byte address 0x4 - core index']
  #allocation1 [shape = 'u32[72,128]{1,0:T(1,128)}', space=vmem, size = 0x9000, scoped, tag = 'internal scratch']
  %s0 = inlined_call_operand.vmem [shape: f32[32,256], index: 0, kind: input, shape index: {}]
  %s1 = inlined_call_operand.vmem [shape: f32[2,32,32], index: 1, kind: input, shape index: {}]
  %s2 = inlined_call_operand.vmem [shape: f32[2,32,1], index: 2, kind: input, shape index: {}]
  %s3 = inlined_call_operand.vmem [shape: f32[2,32,1], index: 3, kind: input, shape index: {}]
  %s4 = inlined_call_operand.vmem [shape: f32[2,32,1], index: 4, kind: input, shape index: {}]
  %s5 = inlined_call_operand.vmem [shape: f32[4,32], index: 5, kind: input, shape index: {}]
  %s6 = inlined_call_operand.vmem [shape: f32[4,1], index: 6, kind: input, shape index: {}]
  %s7 = inlined_call_operand.hbm [shape: f32[4,256], index: 7, kind: output, shape index: {}]
  %s8 = sld [smem:[#allocation0]]
  $region38: #{tpu_custom_call.1} parent=0
    _
  %s10 = ssub.s32 1, %s8
  %s11 = scalar_select 0, %s10, %s8
  $region1: #{tpu_custom_call.1} parent=0
    #allocation2 [shape = 'u8[4096]{0}', space=vmem, size = 0x1000, scoped, tag = 'output window, operand 0, single buffered']
    #allocation3 [shape = 's32[1]{0}', space=sflag, size = 0x4, scoped, tag = 'scoped memory for tpu_custom_call.1']
    %12 = vsyncpa [#allocation3], 0
    // Predicated region
    $region2: #{tpu_custom_call.1} parent=1 // pred_check
      _
    $region3: #{tpu_custom_call.1} parent=1 // pred_check_branch
      %14 = sbr.rel (0) target = $region5
    $region4: #{tpu_custom_call.1} parent=1 // pred_region
      _
    $region5: #{tpu_custom_call.1} parent=1 // pred_fallthru
      _
    // Predicated region
    $region6: #{tpu_custom_call.1} parent=1 // pred_check
      _
    $region7: #{tpu_custom_call.1} parent=1 // pred_check_branch
      %16 = sbr.rel (0) target = $region9
    $region8: #{tpu_custom_call.1} parent=1 // pred_region
      _
    $region9: #{tpu_custom_call.1} parent=1 // pred_fallthru
      _
    // Predicated region
    $region10: #{tpu_custom_call.1} parent=1 // pred_check
      _
    $region11: #{tpu_custom_call.1} parent=1 // pred_check_branch
      %18 = sbr.rel (0) target = $region13
    $region12: #{tpu_custom_call.1} parent=1 // pred_region
      _
    $region13: #{tpu_custom_call.1} parent=1 // pred_fallthru
      _
    // Predicated region
    $region14: #{tpu_custom_call.1} parent=1 // pred_check
      _
    $region15: #{tpu_custom_call.1} parent=1 // pred_check_branch
      %20 = sbr.rel (0) target = $region17
    $region16: #{tpu_custom_call.1} parent=1 // pred_region
      _
    $region17: #{tpu_custom_call.1} parent=1 // pred_fallthru
      _
    // Predicated region
    $region18: #{tpu_custom_call.1} parent=1 // pred_check
      _
    $region19: #{tpu_custom_call.1} parent=1 // pred_check_branch
      %22 = sbr.rel (0) target = $region21
    $region20: #{tpu_custom_call.1} parent=1 // pred_region
      _
    $region21: #{tpu_custom_call.1} parent=1 // pred_fallthru
      _
    // Predicated region
    $region22: #{tpu_custom_call.1} parent=1 // pred_check
      _
    $region23: #{tpu_custom_call.1} parent=1 // pred_check_branch
      %24 = sbr.rel (0) target = $region25
    $region24: #{tpu_custom_call.1} parent=1 // pred_region
      _
    $region25: #{tpu_custom_call.1} parent=1 // pred_fallthru
      _
    // Predicated region
    $region26: #{tpu_custom_call.1} parent=1 // pred_check
      _
    $region27: #{tpu_custom_call.1} parent=1 // pred_check_branch
      %26 = sbr.rel (0) target = $region29
    $region28: #{tpu_custom_call.1} parent=1 // pred_region
      _
    $region29: #{tpu_custom_call.1} parent=1 // pred_fallthru
      _
    %v27 = vld [vmem:[%s0] sm:$0xff]
    %v28 = vld [vmem:[%s0 + $0x8] sm:$0xff]
    %v29 = vld [vmem:[%s0 + $0x10] sm:$0xff]
    %v30 = vld [vmem:[%s0 + $0x18] sm:$0xff]
    %v31 = vld [vmem:[%s0 + $0x20] sm:$0xff]
    %v32 = vld [vmem:[%s0 + $0x28] sm:$0xff]
    %v33 = vld [vmem:[%s0 + $0x30] sm:$0xff]
    %v34 = vld [vmem:[%s0 + $0x38] sm:$0xff]
    %v35 = vld [vmem:[%s1] sm:$0xff]
    %v36 = vld [vmem:[%s1 + $0x8] sm:$0xff]
    %v37 = vld [vmem:[%s1 + $0x10] sm:$0xff]
    %v38 = vld [vmem:[%s1 + $0x18] sm:$0xff]
    %v39 = vld [vmem:[%s2] sm:$0xff]
    %v40 = vld [vmem:[%s2 + $0x8] sm:$0xff]
    %v41 = vld [vmem:[%s2 + $0x10] sm:$0xff]
    %v42 = vld [vmem:[%s2 + $0x18] sm:$0xff]
    %44 = vset.pattern.permute.xlu0 0
    %45 = vperm.xlu0 %44, %v39
    %v46 = vpop.permute.xlu0 %45
    %49 = vset.pattern.permute.xlu0 0
    %50 = vperm.xlu0 %49, %v40
    %v51 = vpop.permute.xlu0 %50
    %54 = vset.pattern.permute.xlu0 0
    %55 = vperm.xlu0 %54, %v41
    %v56 = vpop.permute.xlu0 %55
    %59 = vset.pattern.permute.xlu0 0
    %60 = vperm.xlu0 %59, %v42
    %v61 = vpop.permute.xlu0 %60
    %vm63 = vcmask 261120
    %v65 = vsel %vm63, %v35, 0
    %v68 = vsel %vm63, %v36, 0
    %v71 = vsel %vm63, %v37, 0
    %v74 = vsel %vm63, %v38, 0
    %76 = vmatpush.msra.mxu0 0.0
    %77 = vmatpush.msra.mxu0 0.0
    %78 = vmatpush.msra.mxu0 0.0
    %79 = vmatpush.msra.mxu0 0.0
    %80 = vmatpush.msra.mxu0 0.0
    %81 = vmatpush.msra.mxu0 0.0
    %82 = vmatpush.msra.mxu0 0.0
    %83 = vmatpush.msra.mxu0 0.0
    %84 = vmatpush.msra.mxu0 0.0
    %85 = vmatpush.msra.mxu0 0.0
    %86 = vmatpush.msra.mxu0 0.0
    %87 = vmatpush.msra.mxu0 0.0
    %88 = vmatpush.msra.mxu0 %v33
    %89 = vmatpush.msra.mxu0 %v31
    %90 = vmatpush.msra.mxu0 %v29
    %91 = vmatpush.msra.mxu0 %v27
    %92 = vmatmul.f32.gmra.mxu0 %v65
    %v93 = vpop.f32.mrf.mxu0
    %v94 = vadd.f32 %v46, %v93
    %95 = vmatmul.f32.gmra.mxu0 %v68
    %v96 = vpop.f32.mrf.mxu0
    %v97 = vadd.f32 %v51, %v96
    %98 = vmatmul.f32.gmra.mxu0 %v71
    %v99 = vpop.f32.mrf.mxu0
    %v100 = vadd.f32 %v56, %v99
    %101 = vmatmul.f32.gmra.mxu0 %v74
    %v102 = vpop.f32.mrf.mxu0
    %v103 = vadd.f32 %v61, %v102
    %104 = vdwg.mxu0
    %105 = vmatpush.msra.mxu0 0.0
    %106 = vmatpush.msra.mxu0 0.0
    %107 = vmatpush.msra.mxu0 0.0
    %108 = vmatpush.msra.mxu0 0.0
    %109 = vmatpush.msra.mxu0 0.0
    %110 = vmatpush.msra.mxu0 0.0
    %111 = vmatpush.msra.mxu0 0.0
    %112 = vmatpush.msra.mxu0 0.0
    %113 = vmatpush.msra.mxu0 0.0
    %114 = vmatpush.msra.mxu0 0.0
    %115 = vmatpush.msra.mxu0 0.0
    %116 = vmatpush.msra.mxu0 0.0
    %117 = vmatpush.msra.mxu0 %v34
    %118 = vmatpush.msra.mxu0 %v32
    %119 = vmatpush.msra.mxu0 %v30
    %120 = vmatpush.msra.mxu0 %v28
    %121 = vmatmul.f32.gmra.mxu0 %v65
    %v122 = vpop.f32.mrf.mxu0
    %v123 = vadd.f32 %v46, %v122
    %124 = vmatmul.f32.gmra.mxu0 %v68
    %v125 = vpop.f32.mrf.mxu0
    %v126 = vadd.f32 %v51, %v125
    %127 = vmatmul.f32.gmra.mxu0 %v71
    %v128 = vpop.f32.mrf.mxu0
    %v129 = vadd.f32 %v56, %v128
    %130 = vmatmul.f32.gmra.mxu0 %v74
    %v131 = vpop.f32.mrf.mxu0
    %v132 = vadd.f32 %v61, %v131
    %133 = vdwg.mxu0
    %v134 = vadd.f32 %v94, %v97
    %v135 = vadd.f32 %v134, %v100
    %v136 = vadd.f32 %v135, %v103
    %v137 = vrot.slane %v136, 4
    %v138 = vadd.f32 %v136, %v137
    %v139 = vrot.slane %v138, 2
    %v140 = vadd.f32 %v138, %v139
    %v141 = vrot.slane %v140, 1
    %v142 = vadd.f32 %v140, %v141
    %v143 = vadd.f32 %v123, %v126
    %v144 = vadd.f32 %v143, %v129
    %v145 = vadd.f32 %v144, %v132
    %v146 = vrot.slane %v145, 4
    %v147 = vadd.f32 %v145, %v146
    %v148 = vrot.slane %v147, 2
    %v149 = vadd.f32 %v147, %v148
    %v150 = vrot.slane %v149, 1
    %v151 = vadd.f32 %v149, %v150
    %v152 = vmul.f32 %v142, 0.03125
    %v153 = vmul.f32 %v151, 0.03125
    %v154 = vmul.f32 %v94, %v94
    %v155 = vmul.f32 %v123, %v123
    %v156 = vmul.f32 %v97, %v97
    %v157 = vmul.f32 %v126, %v126
    %v158 = vmul.f32 %v100, %v100
    %v159 = vmul.f32 %v129, %v129
    %v160 = vmul.f32 %v103, %v103
    %v161 = vmul.f32 %v132, %v132
    %v162 = vadd.f32 %v154, %v156
    %v163 = vadd.f32 %v162, %v158
    %v164 = vadd.f32 %v163, %v160
    %v165 = vrot.slane %v164, 4
    %v166 = vadd.f32 %v164, %v165
    %v167 = vrot.slane %v166, 2
    %v168 = vadd.f32 %v166, %v167
    %v169 = vrot.slane %v168, 1
    %v170 = vadd.f32 %v168, %v169
    %v171 = vadd.f32 %v155, %v157
    %v172 = vadd.f32 %v171, %v159
    %v173 = vadd.f32 %v172, %v161
    %v174 = vrot.slane %v173, 4
    %v175 = vadd.f32 %v173, %v174
    %v176 = vrot.slane %v175, 2
    %v177 = vadd.f32 %v175, %v176
    %v178 = vrot.slane %v177, 1
    %v179 = vadd.f32 %v177, %v178
    %v180 = vmul.f32 %v170, 0.03125
    %v181 = vmul.f32 %v179, 0.03125
    %v182 = vmul.f32 %v152, %v152
    %v183 = vmul.f32 %v153, %v153
    %v184 = vsub.f32 %v180, %v182
    %v185 = vsub.f32 %v181, %v183
    %v186 = vmax.f32 %v184, 0.0
    %v187 = vmax.f32 %v185, 0.0
    %v188 = vsub.f32 %v94, %v152
    %v189 = vsub.f32 %v123, %v153
    %v190 = vsub.f32 %v97, %v152
    %v191 = vsub.f32 %v126, %v153
    %v192 = vsub.f32 %v100, %v152
    %v193 = vsub.f32 %v129, %v153
    %v194 = vsub.f32 %v103, %v152
    %v195 = vsub.f32 %v132, %v153
    %v196 = vadd.f32 %v186, 1e-05
    %v197 = vadd.f32 %v187, 1e-05
    %v198 = vrsqrt.pop %v196
    %v199 = vmul.f32 %v198, %v196
    %v200 = vmul.f32 %v199, %v198
    %v201 = vmul.f32 0.5, %v200
    %v202 = vsub.f32 1.5, %v201
    %v203 = vmul.f32 %v198, %v202
    %vm204 = vweird.f32 %v196
    %vm205 = vweird.f32 %v198
    %vm206 = vmor %vm204, %vm205
    %v207 = vsel %vm206, %v198, %v203
    %v208 = vrsqrt.pop %v197
    %v209 = vmul.f32 %v208, %v197
    %v210 = vmul.f32 %v209, %v208
    %v211 = vmul.f32 0.5, %v210
    %v212 = vsub.f32 1.5, %v211
    %v213 = vmul.f32 %v208, %v212
    %vm214 = vweird.f32 %v197
    %vm215 = vweird.f32 %v208
    %vm216 = vmor %vm214, %vm215
    %v217 = vsel %vm216, %v208, %v213
    %v218 = vmul.f32 %v188, %v207
    %v219 = vmul.f32 %v189, %v217
    %v220 = vmul.f32 %v190, %v207
    %v221 = vmul.f32 %v191, %v217
    %v222 = vmul.f32 %v192, %v207
    %v223 = vmul.f32 %v193, %v217
    %v224 = vmul.f32 %v194, %v207
    %v225 = vmul.f32 %v195, %v217
    %v226 = vld [vmem:[%s3] sm:$0xff]
    %v227 = vld [vmem:[%s3 + $0x8] sm:$0xff]
    %v228 = vld [vmem:[%s3 + $0x10] sm:$0xff]
    %v229 = vld [vmem:[%s3 + $0x18] sm:$0xff]
    %231 = vset.pattern.permute.xlu0 0
    %232 = vperm.xlu0 %231, %v226
    %v233 = vpop.permute.xlu0 %232
    %236 = vset.pattern.permute.xlu0 0
    %237 = vperm.xlu0 %236, %v227
    %v238 = vpop.permute.xlu0 %237
    %241 = vset.pattern.permute.xlu0 0
    %242 = vperm.xlu0 %241, %v228
    %v243 = vpop.permute.xlu0 %242
    %246 = vset.pattern.permute.xlu0 0
    %247 = vperm.xlu0 %246, %v229
    %v248 = vpop.permute.xlu0 %247
    %v250 = vmul.f32 %v218, %v233
    %v251 = vmul.f32 %v219, %v233
    %v252 = vmul.f32 %v220, %v238
    %v253 = vmul.f32 %v221, %v238
    %v254 = vmul.f32 %v222, %v243
    %v255 = vmul.f32 %v223, %v243
    %v256 = vmul.f32 %v224, %v248
    %v257 = vmul.f32 %v225, %v248
    %v258 = vld [vmem:[%s4] sm:$0xff]
    %v259 = vld [vmem:[%s4 + $0x8] sm:$0xff]
    %v260 = vld [vmem:[%s4 + $0x10] sm:$0xff]
    %v261 = vld [vmem:[%s4 + $0x18] sm:$0xff]
    %263 = vset.pattern.permute.xlu0 0
    %264 = vperm.xlu0 %263, %v258
    %v265 = vpop.permute.xlu0 %264
    %268 = vset.pattern.permute.xlu0 0
    %269 = vperm.xlu0 %268, %v259
    %v270 = vpop.permute.xlu0 %269
    %273 = vset.pattern.permute.xlu0 0
    %274 = vperm.xlu0 %273, %v260
    %v275 = vpop.permute.xlu0 %274
    %278 = vset.pattern.permute.xlu0 0
    %279 = vperm.xlu0 %278, %v261
    %v280 = vpop.permute.xlu0 %279
    %v282 = vadd.f32 %v250, %v265
    %v283 = vadd.f32 %v251, %v265
    %v284 = vadd.f32 %v252, %v270
    %v285 = vadd.f32 %v253, %v270
    %v286 = vadd.f32 %v254, %v275
    %v287 = vadd.f32 %v255, %v275
    %v288 = vadd.f32 %v256, %v280
    %v289 = vadd.f32 %v257, %v280
    %v290 = vmax.f32 %v282, 0.0
    %v291 = vmax.f32 %v283, 0.0
    %v292 = vmax.f32 %v284, 0.0
    %v293 = vmax.f32 %v285, 0.0
    %v294 = vmax.f32 %v286, 0.0
    %v295 = vmax.f32 %v287, 0.0
    %v296 = vmax.f32 %v288, 0.0
    %v297 = vmax.f32 %v289, 0.0
    %s298 = scalar_lea.vmem %s1, 32
    %v299 = vld [vmem:[%s298] sm:$0xff]
    %v300 = vld [vmem:[%s298 + $0x8] sm:$0xff]
    %v301 = vld [vmem:[%s298 + $0x10] sm:$0xff]
    %v302 = vld [vmem:[%s298 + $0x18] sm:$0xff]
    %s303 = scalar_lea.vmem %s2, 32
    %v304 = vld [vmem:[%s303] sm:$0xff]
    %v305 = vld [vmem:[%s303 + $0x8] sm:$0xff]
    %v306 = vld [vmem:[%s303 + $0x10] sm:$0xff]
    %v307 = vld [vmem:[%s303 + $0x18] sm:$0xff]
    %309 = vset.pattern.permute.xlu0 0
    %310 = vperm.xlu0 %309, %v304
    %v311 = vpop.permute.xlu0 %310
    %314 = vset.pattern.permute.xlu0 0
    %315 = vperm.xlu0 %314, %v305
    %v316 = vpop.permute.xlu0 %315
    %319 = vset.pattern.permute.xlu0 0
    %320 = vperm.xlu0 %319, %v306
    %v321 = vpop.permute.xlu0 %320
    %324 = vset.pattern.permute.xlu0 0
    %325 = vperm.xlu0 %324, %v307
    %v326 = vpop.permute.xlu0 %325
    %v329 = vsel %vm63, %v299, 0
    %v332 = vsel %vm63, %v300, 0
    %v335 = vsel %vm63, %v301, 0
    %v338 = vsel %vm63, %v302, 0
    %340 = vmatpush.msra.mxu0 0.0
    %341 = vmatpush.msra.mxu0 0.0
    %342 = vmatpush.msra.mxu0 0.0
    %343 = vmatpush.msra.mxu0 0.0
    %344 = vmatpush.msra.mxu0 0.0
    %345 = vmatpush.msra.mxu0 0.0
    %346 = vmatpush.msra.mxu0 0.0
    %347 = vmatpush.msra.mxu0 0.0
    %348 = vmatpush.msra.mxu0 0.0
    %349 = vmatpush.msra.mxu0 0.0
    %350 = vmatpush.msra.mxu0 0.0
    %351 = vmatpush.msra.mxu0 0.0
    %352 = vmatpush.msra.mxu0 %v296
    %353 = vmatpush.msra.mxu0 %v294
    %354 = vmatpush.msra.mxu0 %v292
    %355 = vmatpush.msra.mxu0 %v290
    %356 = vmatmul.f32.gmra.mxu0 %v329
    %v357 = vpop.f32.mrf.mxu0
    %v358 = vadd.f32 %v311, %v357
    %359 = vmatmul.f32.gmra.mxu0 %v332
    %v360 = vpop.f32.mrf.mxu0
    %v361 = vadd.f32 %v316, %v360
    %362 = vmatmul.f32.gmra.mxu0 %v335
    %v363 = vpop.f32.mrf.mxu0
    %v364 = vadd.f32 %v321, %v363
    %365 = vmatmul.f32.gmra.mxu0 %v338
    %v366 = vpop.f32.mrf.mxu0
    %v367 = vadd.f32 %v326, %v366
    %368 = vdwg.mxu0
    %369 = vmatpush.msra.mxu0 0.0
    %370 = vmatpush.msra.mxu0 0.0
    %371 = vmatpush.msra.mxu0 0.0
    %372 = vmatpush.msra.mxu0 0.0
    %373 = vmatpush.msra.mxu0 0.0
    %374 = vmatpush.msra.mxu0 0.0
    %375 = vmatpush.msra.mxu0 0.0
    %376 = vmatpush.msra.mxu0 0.0
    %377 = vmatpush.msra.mxu0 0.0
    %378 = vmatpush.msra.mxu0 0.0
    %379 = vmatpush.msra.mxu0 0.0
    %380 = vmatpush.msra.mxu0 0.0
    %381 = vmatpush.msra.mxu0 %v297
    %382 = vmatpush.msra.mxu0 %v295
    %383 = vmatpush.msra.mxu0 %v293
    %384 = vmatpush.msra.mxu0 %v291
    %385 = vmatmul.f32.gmra.mxu0 %v329
    %v386 = vpop.f32.mrf.mxu0
    %v387 = vadd.f32 %v311, %v386
    %388 = vmatmul.f32.gmra.mxu0 %v332
    %v389 = vpop.f32.mrf.mxu0
    %v390 = vadd.f32 %v316, %v389
    %391 = vmatmul.f32.gmra.mxu0 %v335
    %v392 = vpop.f32.mrf.mxu0
    %v393 = vadd.f32 %v321, %v392
    %394 = vmatmul.f32.gmra.mxu0 %v338
    %v395 = vpop.f32.mrf.mxu0
    %v396 = vadd.f32 %v326, %v395
    %397 = vdwg.mxu0
    %v398 = vadd.f32 %v358, %v361
    %v399 = vadd.f32 %v398, %v364
    %v400 = vadd.f32 %v399, %v367
    %v401 = vrot.slane %v400, 4
    %v402 = vadd.f32 %v400, %v401
    %v403 = vrot.slane %v402, 2
    %v404 = vadd.f32 %v402, %v403
    %v405 = vrot.slane %v404, 1
    %v406 = vadd.f32 %v404, %v405
    %v407 = vadd.f32 %v387, %v390
    %v408 = vadd.f32 %v407, %v393
    %v409 = vadd.f32 %v408, %v396
    %v410 = vrot.slane %v409, 4
    %v411 = vadd.f32 %v409, %v410
    %v412 = vrot.slane %v411, 2
    %v413 = vadd.f32 %v411, %v412
    %v414 = vrot.slane %v413, 1
    %v415 = vadd.f32 %v413, %v414
    %v416 = vmul.f32 %v406, 0.03125
    %v417 = vmul.f32 %v415, 0.03125
    %v418 = vmul.f32 %v358, %v358
    %v419 = vmul.f32 %v387, %v387
    %v420 = vmul.f32 %v361, %v361
    %v421 = vmul.f32 %v390, %v390
    %v422 = vmul.f32 %v364, %v364
    %v423 = vmul.f32 %v393, %v393
    %v424 = vmul.f32 %v367, %v367
    %v425 = vmul.f32 %v396, %v396
    %v426 = vadd.f32 %v418, %v420
    %v427 = vadd.f32 %v426, %v422
    %v428 = vadd.f32 %v427, %v424
    %v429 = vrot.slane %v428, 4
    %v430 = vadd.f32 %v428, %v429
    %v431 = vrot.slane %v430, 2
    %v432 = vadd.f32 %v430, %v431
    %v433 = vrot.slane %v432, 1
    %v434 = vadd.f32 %v432, %v433
    %v435 = vadd.f32 %v419, %v421
    %v436 = vadd.f32 %v435, %v423
    %v437 = vadd.f32 %v436, %v425
    %v438 = vrot.slane %v437, 4
    %v439 = vadd.f32 %v437, %v438
    %v440 = vrot.slane %v439, 2
    %v441 = vadd.f32 %v439, %v440
    %v442 = vrot.slane %v441, 1
    %v443 = vadd.f32 %v441, %v442
    %v444 = vmul.f32 %v434, 0.03125
    %v445 = vmul.f32 %v443, 0.03125
    %v446 = vmul.f32 %v416, %v416
    %v447 = vmul.f32 %v417, %v417
    %v448 = vsub.f32 %v444, %v446
    %v449 = vsub.f32 %v445, %v447
    %v450 = vmax.f32 %v448, 0.0
    %v451 = vmax.f32 %v449, 0.0
    %v452 = vsub.f32 %v358, %v416
    %v453 = vsub.f32 %v387, %v417
    %v454 = vsub.f32 %v361, %v416
    %v455 = vsub.f32 %v390, %v417
    %v456 = vsub.f32 %v364, %v416
    %v457 = vsub.f32 %v393, %v417
    %v458 = vsub.f32 %v367, %v416
    %v459 = vsub.f32 %v396, %v417
    %v460 = vadd.f32 %v450, 1e-05
    %v461 = vadd.f32 %v451, 1e-05
    %v462 = vrsqrt.pop %v460
    %v463 = vmul.f32 %v462, %v460
    %v464 = vmul.f32 %v463, %v462
    %v465 = vmul.f32 0.5, %v464
    %v466 = vsub.f32 1.5, %v465
    %v467 = vmul.f32 %v462, %v466
    %vm468 = vweird.f32 %v460
    %vm469 = vweird.f32 %v462
    %vm470 = vmor %vm468, %vm469
    %v471 = vsel %vm470, %v462, %v467
    %v472 = vrsqrt.pop %v461
    %v473 = vmul.f32 %v472, %v461
    %v474 = vmul.f32 %v473, %v472
    %v475 = vmul.f32 0.5, %v474
    %v476 = vsub.f32 1.5, %v475
    %v477 = vmul.f32 %v472, %v476
    %vm478 = vweird.f32 %v461
    %vm479 = vweird.f32 %v472
    %vm480 = vmor %vm478, %vm479
    %v481 = vsel %vm480, %v472, %v477
    %v482 = vmul.f32 %v452, %v471
    %v483 = vmul.f32 %v453, %v481
    %v484 = vmul.f32 %v454, %v471
    %v485 = vmul.f32 %v455, %v481
    %v486 = vmul.f32 %v456, %v471
    %v487 = vmul.f32 %v457, %v481
    %v488 = vmul.f32 %v458, %v471
    %v489 = vmul.f32 %v459, %v481
    %s490 = scalar_lea.vmem %s3, 32
    %v491 = vld [vmem:[%s490] sm:$0xff]
    %v492 = vld [vmem:[%s490 + $0x8] sm:$0xff]
    %v493 = vld [vmem:[%s490 + $0x10] sm:$0xff]
    %v494 = vld [vmem:[%s490 + $0x18] sm:$0xff]
    %496 = vset.pattern.permute.xlu0 0
    %497 = vperm.xlu0 %496, %v491
    %v498 = vpop.permute.xlu0 %497
    %501 = vset.pattern.permute.xlu0 0
    %502 = vperm.xlu0 %501, %v492
    %v503 = vpop.permute.xlu0 %502
    %506 = vset.pattern.permute.xlu0 0
    %507 = vperm.xlu0 %506, %v493
    %v508 = vpop.permute.xlu0 %507
    %511 = vset.pattern.permute.xlu0 0
    %512 = vperm.xlu0 %511, %v494
    %v513 = vpop.permute.xlu0 %512
    %v515 = vmul.f32 %v482, %v498
    %v516 = vmul.f32 %v483, %v498
    %v517 = vmul.f32 %v484, %v503
    %v518 = vmul.f32 %v485, %v503
    %v519 = vmul.f32 %v486, %v508
    %v520 = vmul.f32 %v487, %v508
    %v521 = vmul.f32 %v488, %v513
    %v522 = vmul.f32 %v489, %v513
    %s523 = scalar_lea.vmem %s4, 32
    %v524 = vld [vmem:[%s523] sm:$0xff]
    %v525 = vld [vmem:[%s523 + $0x8] sm:$0xff]
    %v526 = vld [vmem:[%s523 + $0x10] sm:$0xff]
    %v527 = vld [vmem:[%s523 + $0x18] sm:$0xff]
    %529 = vset.pattern.permute.xlu0 0
    %530 = vperm.xlu0 %529, %v524
    %v531 = vpop.permute.xlu0 %530
    %534 = vset.pattern.permute.xlu0 0
    %535 = vperm.xlu0 %534, %v525
    %v536 = vpop.permute.xlu0 %535
    %539 = vset.pattern.permute.xlu0 0
    %540 = vperm.xlu0 %539, %v526
    %v541 = vpop.permute.xlu0 %540
    %544 = vset.pattern.permute.xlu0 0
    %545 = vperm.xlu0 %544, %v527
    %v546 = vpop.permute.xlu0 %545
    %v548 = vadd.f32 %v515, %v531
    %v549 = vadd.f32 %v516, %v531
    %v550 = vadd.f32 %v517, %v536
    %v551 = vadd.f32 %v518, %v536
    %v552 = vadd.f32 %v519, %v541
    %v553 = vadd.f32 %v520, %v541
    %v554 = vadd.f32 %v521, %v546
    %v555 = vadd.f32 %v522, %v546
    %v556 = vmax.f32 %v548, 0.0
    %v557 = vmax.f32 %v549, 0.0
    %v558 = vmax.f32 %v550, 0.0
    %v559 = vmax.f32 %v551, 0.0
    %v560 = vmax.f32 %v552, 0.0
    %v561 = vmax.f32 %v553, 0.0
    %v562 = vmax.f32 %v554, 0.0
    %v563 = vmax.f32 %v555, 0.0
    %v564 = vld [vmem:[%s5] sm:$0xf]
    %v565 = vld [vmem:[%s6] sm:$0xf]
    %567 = vset.pattern.permute.xlu0 0
    %568 = vperm.xlu0 %567, %v565
    %v569 = vpop.permute.xlu0 %568
    %v572 = vsel %vm63, %v564, 0
    %574 = vmatpush.msra.mxu0 0.0
    %575 = vmatpush.msra.mxu0 0.0
    %576 = vmatpush.msra.mxu0 0.0
    %577 = vmatpush.msra.mxu0 0.0
    %578 = vmatpush.msra.mxu0 0.0
    %579 = vmatpush.msra.mxu0 0.0
    %580 = vmatpush.msra.mxu0 0.0
    %581 = vmatpush.msra.mxu0 0.0
    %582 = vmatpush.msra.mxu0 0.0
    %583 = vmatpush.msra.mxu0 0.0
    %584 = vmatpush.msra.mxu0 0.0
    %585 = vmatpush.msra.mxu0 0.0
    %586 = vmatpush.msra.mxu0 %v562
    %587 = vmatpush.msra.mxu0 %v560
    %588 = vmatpush.msra.mxu0 %v558
    %589 = vmatpush.msra.mxu0 %v556
    %590 = vmatmul.f32.gmra.mxu0 %v572
    %v591 = vpop.f32.mrf.mxu0
    %v592 = vadd.f32 %v569, %v591
    %593 = vdwg.mxu0
    %594 = vmatpush.msra.mxu0 0.0
    %595 = vmatpush.msra.mxu0 0.0
    %596 = vmatpush.msra.mxu0 0.0
    %597 = vmatpush.msra.mxu0 0.0
    %598 = vmatpush.msra.mxu0 0.0
    %599 = vmatpush.msra.mxu0 0.0
    %600 = vmatpush.msra.mxu0 0.0
    %601 = vmatpush.msra.mxu0 0.0
    %602 = vmatpush.msra.mxu0 0.0
    %603 = vmatpush.msra.mxu0 0.0
    %604 = vmatpush.msra.mxu0 0.0
    %605 = vmatpush.msra.mxu0 0.0
    %606 = vmatpush.msra.mxu0 %v563
    %607 = vmatpush.msra.mxu0 %v561
    %608 = vmatpush.msra.mxu0 %v559
    %609 = vmatpush.msra.mxu0 %v557
    %610 = vmatmul.f32.gmra.mxu0 %v572
    %v611 = vpop.f32.mrf.mxu0
    %v612 = vadd.f32 %v569, %v611
    %613 = vdwg.mxu0
    %v616 = vrot.slane %v612, 4
    %vm617 = vcmask 1043456
    %v618 = vsel %vm617, %v592, %v616
    %620 = vst [vmem:[#allocation2] sm:$0xff] %v618
    // Predicated region
    $region30: #{tpu_custom_call.1} parent=1 // pred_check
      _
    $region31: #{tpu_custom_call.1} parent=1 // pred_check_branch
      %622 = sbr.rel (0) target = $region33
    $region32: #{tpu_custom_call.1} parent=1 // pred_region
      %624 = vsyncadd [#allocation3], 0
      %s626 = sshll.u32 [#allocation2], 4
      %s627 = int_to_ptr.vmem [resolvable:$true] %s626
      %s628 = sshll.u32 %s7, 4
      %s629 = int_to_ptr.hbm [resolvable:$true] %s628
      %631 = dma.vmem_to_hbm [thread:$0]  %s627, 128, %s629, [#allocation3]
    $region33: #{tpu_custom_call.1} parent=1 // pred_fallthru
      _
    // Predicated region
    $region34: #{tpu_custom_call.1} parent=1 // pred_check
      _
    $region35: #{tpu_custom_call.1} parent=1 // pred_check_branch
      %633 = sbr.rel (0) target = $region37
    $region36: #{tpu_custom_call.1} parent=1 // pred_region
      %635 = dma.done [#allocation3], 128
    $region37: #{tpu_custom_call.1} parent=1 // pred_fallthru
      _
    %636 = vsyncpa [#allocation3], 1

</llo_original>
